<compile_context>
chip_gen: v6e
topology: v6e:2x2x1
jax: 0.10.0
libtpu: 0.0.40
codegen_flags: <defaults>
</compile_context>

<pallas_src>
import functools

import jax
import jax.numpy as jnp
import numpy as np
from jax.experimental import pallas as pl
from jax.experimental.pallas import tpu as pltpu

_LANES = 128
_GATHER_MIN_V = 2048        # below this, streaming whole rows is cheap enough


# ---------------------------------------------------------------------------
# Path 1: streaming (TM, V) row tiles.
# ---------------------------------------------------------------------------
def _stream_kernel(pred_ref, tgt_ref, mask_ref, loss_ref, msum_ref,
                   *, n_rows, tiles_per_split, tile_rows):
    """pred_ref: (TM, V) native dtype; tgt/mask: (TM, 1); loss/msum: (1, 1) f32."""
    s = pl.program_id(0)          # row-split id ("parallel" -> megacore on v7x)
    i = pl.program_id(1)          # tile id within the split (reduction axis)

    @pl.when(i == 0)
    def _():
        loss_ref[...] = jnp.zeros_like(loss_ref)
        msum_ref[...] = jnp.zeros_like(msum_ref)

    # Row validity (partial last tile, clamped redundant split tiles), applied
    # only to the cheap (TM, 1) operands: invalid rows get target -1 (never
    # matches a column id) and mask 0, so OOB garbage in pred is never selected
    # and contributes exactly zero.  No full-width `& valid` on (TM, V).
    row0 = (s * tiles_per_split + i) * tile_rows
    row_ids = row0 + jax.lax.broadcasted_iota(jnp.int32, (tile_rows, 1), 0)
    valid = row_ids < n_rows                                     # (TM, 1) bool

    tgt = jnp.where(valid, tgt_ref[...], -1)                     # (TM, 1) i32
    msk = jnp.where(valid, mask_ref[...], 0.0)                   # (TM, 1) f32

    pred = pred_ref[...]                                         # (TM, V) native
    col = jax.lax.broadcasted_iota(jnp.int32, (1, pred.shape[1]), 1)  # (1, V)
    sel = col == tgt                                             # bcast -> (TM, V)
    # Exactly one hit per valid row -> native-dtype select + lane reduce is
    # exact; upcast only the (TM, 1) row result.
    picked = jnp.sum(jnp.where(sel, pred, jnp.array(0, dtype=pred.dtype)),
                     axis=-1, keepdims=True).astype(jnp.float32)

    loss_ref[...] += jnp.sum(picked * msk, keepdims=True)  # sign folded in wrapper
    msum_ref[...] += jnp.sum(msk, keepdims=True)


def _lm_criterion_stream(pred_flat, tgt_flat, mask_flat, N, V, itemsize,
                         vmem_cap, two_cores, tile_rows, num_splits):
    tgt_col = tgt_flat.reshape(N, 1)
    mask_col = mask_flat.reshape(N, 1)

    # Sublane packing: 8 rows for 32-bit, 16 for bf16, 32 for 8-bit dtypes.
    row_align = max(8, 32 // itemsize)

    # Per-row VMEM cost: double-buffered pred row + lane-padded (tm, 1) blocks
    # for the int32 target and f32 mask (each (tm, 1) block occupies tm*128 words).
    per_row_bytes = 2 * V * itemsize + 2 * 2 * _LANES * 4

    if tile_rows is not None:
        tm = max(8, (int(tile_rows) // 8) * 8)
        tm = min(tm, max(8, ((N + 7) // 8) * 8))
    elif N < 8:
        tm = N                                    # single full-extent block
    else:
        budget = int(vmem_cap * 0.55)             # headroom (v7x has only 64 MiB)
        fit_tm = budget // per_row_bytes
        target_tm = max((4 << 20) // (V * itemsize), row_align)   # ~4 MiB blocks
        tm = min(fit_tm, target_tm, 8192)
        tm = min(tm, ((N + row_align - 1) // row_align) * row_align)
        tm = max(8, (tm // row_align) * row_align)

    tiles_total = pl.cdiv(N, tm)
    if num_splits is None:
        num_splits = 2 if two_cores else 1        # 1 TC on v5e/v6e, 2 TC on v7x
    S = max(1, min(int(num_splits), tiles_total))
    tiles_per_split = pl.cdiv(tiles_total, S)

    vmem_limit = tm * per_row_bytes + (4 << 20)
    vmem_limit = int(min(vmem_cap, max(vmem_limit, 32 << 20)))

    def _row_block(s_idx, t_idx):
        gt = s_idx * tiles_per_split + t_idx
        # Clamp redundant trailing tiles onto the split's last real tile: the
        # block index then repeats between consecutive steps, so Pallas elides
        # the HBM re-fetch; validity masking in-kernel zeroes the contribution.
        return (jnp.minimum(gt, tiles_total - 1), 0)

    kernel = functools.partial(
        _stream_kernel, n_rows=N, tiles_per_split=tiles_per_split, tile_rows=tm)

    # TODO(synk): on v7x confirm "parallel" actually shards the S axis across
    # the two TensorCores; switch to pltpu.CORE_PARALLEL if it serializes.
    loss_part, mask_part = pl.pallas_call(
        kernel,
        out_shape=(jax.ShapeDtypeStruct((S, 1, 1), jnp.float32),
                   jax.ShapeDtypeStruct((S, 1, 1), jnp.float32)),
        grid_spec=pltpu.PrefetchScalarGridSpec(
            num_scalar_prefetch=0,
            grid=(S, tiles_per_split),
            in_specs=[
                pl.BlockSpec((tm, V), _row_block),
                pl.BlockSpec((tm, 1), _row_block),
                pl.BlockSpec((tm, 1), _row_block),
            ],
            out_specs=[
                pl.BlockSpec((None, 1, 1), lambda s_idx, t_idx: (s_idx, 0, 0)),
                pl.BlockSpec((None, 1, 1), lambda s_idx, t_idx: (s_idx, 0, 0)),
            ],
        ),
        compiler_params=pltpu.CompilerParams(
            dimension_semantics=("parallel", "arbitrary"),
            vmem_limit_bytes=vmem_limit,
        ),
    )(pred_flat, tgt_col, mask_col)

    return -(jnp.sum(loss_part) / jnp.sum(mask_part))


# ---------------------------------------------------------------------------
# Path 2: per-row 128-lane DMA gather (pred stays in HBM).
# ---------------------------------------------------------------------------
def _gather_kernel(lane_ref, toff_ref, mask_ref, pred_hbm, loss_ref, msum_ref,
                   stage_ref, sem_ref, *, n_rows, tile_rows):
    """lane_ref: (Npad,) i32 in SMEM (scalar prefetch); toff/mask: (TM, 1);
    pred_hbm: (N, V) in HBM; stage: (2, TM, 128) VMEM; sem: (2,) DMA sems."""
    i = pl.program_id(0)
    nsteps = pl.num_programs(0)
    slot = i % 2

    def issue(step, slot_):
        base = step * tile_rows

        @pl.loop(0, tile_rows)
        def _(r):
            row = base + r
            row_c = jnp.minimum(row, n_rows - 1)    # pad rows: clamp (never selected)
            lb = lane_ref[row]                      # 128-aligned slab base (SMEM)
            pltpu.make_async_copy(
                pred_hbm.at[pl.ds(row_c, 1), pl.ds(lb, _LANES)],
                stage_ref.at[slot_, pl.ds(r, 1), :],
                sem_ref.at[slot_],
            ).start()

    @pl.when(i == 0)
    def _():
        loss_ref[...] = jnp.zeros_like(loss_ref)
        msum_ref[...] = jnp.zeros_like(msum_ref)
        issue(0, 0)

    @pl.when(i + 1 < nsteps)                        # prefetch next tile's slabs
    def _():
        issue(i + 1, (i + 1) % 2)

    @pl.loop(0, tile_rows)                          # drain current tile's DMAs
    def _(r):
        pltpu.make_async_copy(
            pred_hbm.at[pl.ds(0, 1), pl.ds(0, _LANES)],
            stage_ref.at[slot, pl.ds(0, 1), :],
            sem_ref.at[slot],
        ).wait()

    slab = stage_ref[slot]                                        # (TM, 128) native
    col = jax.lax.broadcasted_iota(jnp.int32, (1, _LANES), 1)
    sel = col == toff_ref[...]                                    # pad rows: -1 -> no hit
    picked = jnp.sum(jnp.where(sel, slab, jnp.array(0, dtype=slab.dtype)),
                     axis=-1, keepdims=True).astype(jnp.float32)
    msk = mask_ref[...]                                           # pad rows: 0
    loss_ref[...] += jnp.sum(picked * msk, keepdims=True)
    msum_ref[...] += jnp.sum(msk, keepdims=True)


def _lm_criterion_gather(pred_flat, tgt_flat, mask_flat, N, V, itemsize,
                         vmem_cap, tile_rows):
    # Rows per grid step: one (1, 128) DMA per row, all kept in flight per tile.
    tm = 256 if tile_rows is None else max(8, (int(tile_rows) // 8) * 8)
    tm = max(8, min(tm, ((N + 7) // 8) * 8))

    n_tiles = pl.cdiv(N, tm)
    n_pad = n_tiles * tm

    # Per-row slab base (128-aligned, clamped so the slab stays in bounds even
    # when V is not a multiple of 128) and offset of the target within it.
    tgt_c = jnp.clip(tgt_flat, 0, V - 1)
    lane_base = jnp.minimum((tgt_c // _LANES) * _LANES, V - _LANES).astype(jnp.int32)
    t_off = (tgt_c - lane_base).astype(jnp.int32)

    pad = n_pad - N
    lane_base_p = jnp.pad(lane_base, (0, pad))                    # any valid base
    t_off_p = jnp.pad(t_off, (0, pad), constant_values=-1)        # never matches
    mask_p = jnp.pad(mask_flat, (0, pad))                         # zero weight

    toff_col = t_off_p.reshape(n_pad, 1)
    mask_col = mask_p.reshape(n_pad, 1)

    need = 2 * tm * _LANES * itemsize + 4 * tm * _LANES * 4 + (4 << 20)
    vmem_limit = int(min(vmem_cap, max(need, 32 << 20)))

    kernel = functools.partial(_gather_kernel, n_rows=N, tile_rows=tm)

    # TODO(synk): shard the row tiles across the two TensorCores on v7x (second
    # "parallel" axis with per-split (1,1) outputs, as in the streaming path).
    loss, msum = pl.pallas_call(
        kernel,
        out_shape=(jax.ShapeDtypeStruct((1, 1), jnp.float32),
                   jax.ShapeDtypeStruct((1, 1), jnp.float32)),
        grid_spec=pltpu.PrefetchScalarGridSpec(
            num_scalar_prefetch=1,                   # lane_base -> SMEM
            grid=(n_tiles,),
            in_specs=[
                pl.BlockSpec((tm, 1), lambda i, lane_ref: (i, 0)),
                pl.BlockSpec((tm, 1), lambda i, lane_ref: (i, 0)),
                pl.BlockSpec(memory_space=pl.ANY),   # pred stays in HBM
            ],
            out_specs=[
                pl.BlockSpec((1, 1), lambda i, lane_ref: (0, 0)),
                pl.BlockSpec((1, 1), lambda i, lane_ref: (0, 0)),
            ],
            scratch_shapes=[
                pltpu.VMEM((2, tm, _LANES), pred_flat.dtype),
                pltpu.SemaphoreType.DMA((2,)),
            ],
        ),
        compiler_params=pltpu.CompilerParams(
            dimension_semantics=("arbitrary",),
            vmem_limit_bytes=vmem_limit,
        ),
    )(lane_base_p, toff_col, mask_col, pred_flat)

    return -(loss[0, 0] / msum[0, 0])


# ---------------------------------------------------------------------------
# Public entry point.
# ---------------------------------------------------------------------------
def _chip_info():
    try:
        vmem_cap = int(pltpu.get_tpu_info().vmem_capacity_bytes)
    except Exception:
        vmem_cap = 64 * 1024 * 1024                 # conservative (v7x) fallback
    try:
        kind = jax.devices()[0].device_kind.lower()
    except Exception:
        kind = ""
    two_cores = ("v7" in kind) or ("tpu7" in kind)  # 2 TensorCores only on v7x
    return vmem_cap, two_cores


@functools.partial(jax.jit,
                   static_argnames=("eos_idx", "tile_rows", "num_splits", "use_gather"))
def language_model_criterion(pred, target, mask, eos_idx,
                             tile_rows=None, num_splits=None, use_gather=None):
    """pred: (B, T, V) f32/bf16 log-probs; target: (B, T) ints; mask: (B, T).

    Returns sum(-pred[n, shifted_target[n]] * mask[n]) / sum(mask).
    Precondition (as in the PyTorch reference): sum(mask) > 0.
    """
    B, T, V = pred.shape
    N = B * T
    itemsize = int(jnp.dtype(pred.dtype).itemsize)
    vmem_cap, two_cores = _chip_info()

    # Glue: shift target left, append eos (== torch.cat([target[:,1:], eos], 1)).
    eos_col = jnp.full((B, 1), eos_idx, dtype=target.dtype)
    target_shifted = jnp.concatenate([target[:, 1:], eos_col], axis=1)

    pred_flat = pred.reshape(N, V)                  # no-copy reshape
    tgt_flat = target_shifted.reshape(N).astype(jnp.int32)
    mask_flat = mask.reshape(N).astype(jnp.float32)

    gather_ok = (V >= _LANES) and (N >= 8) and (itemsize == 4)
    # TODO(synk): extend the DMA-gather path to bf16/fp8 pred (needs 32-bit
    # packed per-row staging to avoid sub-word DMA writes into packed sublanes).
    if use_gather is None:
        gather = gather_ok and (V >= _GATHER_MIN_V)
    else:
        gather = gather_ok and bool(use_gather)

    if gather:
        return _lm_criterion_gather(pred_flat, tgt_flat, mask_flat,
                                    N, V, itemsize, vmem_cap, tile_rows)
    return _lm_criterion_stream(pred_flat, tgt_flat, mask_flat,
                                N, V, itemsize, vmem_cap, two_cores,
                                tile_rows, num_splits)


# ---------------------------------------------------------------------------
# Pure-JAX reference + tests.
# ---------------------------------------------------------------------------
def _reference(pred, target, mask, eos_idx):
    B, T, V = pred.shape
    eos_col = jnp.full((B, 1), eos_idx, dtype=target.dtype)
    tgt = jnp.concatenate([target[:, 1:], eos_col], axis=1).reshape(-1)
    p = pred.reshape(-1, V).astype(jnp.float32)
    picked = jnp.take_along_axis(p, tgt[:, None].astype(jnp.int32), axis=1)[:, 0]
    m = mask.reshape(-1).astype(jnp.float32)
    return jnp.sum(-picked * m) / jnp.sum(m)


if __name__ == "__main__":
    def make_inputs(key, B, T, V, dtype):
        k1, k2, k3 = jax.random.split(key, 3)
        logits = jax.random.normal(k1, (B, T, V), dtype=jnp.float32)
        pred = jax.nn.log_softmax(logits, axis=-1).astype(dtype)
        target = jax.random.randint(k2, (B, T), 0, V, dtype=jnp.int32)
        mask = (jax.random.uniform(k3, (B, T)) > 0.25).astype(jnp.float32)
        mask = mask.at[:, 0].set(1.0)   # precondition: sum(mask) > 0
        return pred, target, mask

    def check(out, ref, tol):
        np.testing.assert_allclose(np.asarray(out), np.asarray(ref),
                                   rtol=tol, atol=tol)

    # 1) Small f32, auto sizing -> streaming path.
    pred, target, mask = make_inputs(jax.random.PRNGKey(0), 2, 8, 32, jnp.float32)
    out = jax.block_until_ready(language_model_criterion(pred, target, mask, 0))
    check(out, _reference(pred, target, mask, 0), 1e-5)

    # 2) Ragged rows (N=22) + forced 2-way split + tiny tiles: exercises the
    #    partial tile, clamped redundant split tile and target sanitizing.
    pred, target, mask = make_inputs(jax.random.PRNGKey(1), 2, 11, 200, jnp.float32)
    out = jax.block_until_ready(language_model_criterion(
        pred, target, mask, 3, tile_rows=8, num_splits=2))
    check(out, _reference(pred, target, mask, 3), 1e-5)

    # 3) bf16 pred streamed in its native dtype (select + reduce in bf16).
    pred, target, mask = make_inputs(jax.random.PRNGKey(2), 2, 8, 256, jnp.bfloat16)
    out = jax.block_until_ready(language_model_criterion(pred, target, mask, 0))
    check(out, _reference(pred, target, mask, 0), 1e-4)

    # 4) DMA-gather path (forced), V not a multiple of 128, multiple grid steps
    #    with padded rows (N=18 -> 3 tiles of 8, slab clamping at the tail).
    pred, target, mask = make_inputs(jax.random.PRNGKey(3), 2, 9, 1000, jnp.float32)
    out = jax.block_until_ready(language_model_criterion(
        pred, target, mask, 1, tile_rows=8, use_gather=True))
    check(out, _reference(pred, target, mask, 1), 1e-5)

    # 5) DMA-gather path selected automatically (V >= 2048, f32).
    pred, target, mask = make_inputs(jax.random.PRNGKey(4), 2, 8, 2048, jnp.float32)
    out = jax.block_until_ready(language_model_criterion(pred, target, mask, 0))
    check(out, _reference(pred, target, mask, 0), 1e-5)

    print("KERNEL_OK")
</pallas_src>

<mosaic_0001>
module attributes {stable_mosaic.version = 11 : i64} {
  func.func @_stream_kernel(%arg0: i32, %arg1: i32, %arg2: memref<16x32xf32, #tpu.memory_space<vmem>>, %arg3: memref<16x1xi32, #tpu.memory_space<vmem>>, %arg4: memref<16x1xf32, #tpu.memory_space<vmem>>, %arg5: memref<1x1x1xf32, #tpu.memory_space<vmem>>, %arg6: memref<1x1x1xf32, #tpu.memory_space<vmem>>) attributes {dimension_semantics = [#tpu.dimension_semantics<parallel>, #tpu.dimension_semantics<arbitrary>], iteration_bounds = array<i64: 1, 1>, scalar_prefetch = 0 : i64, scratch_operands = 0 : i64, tpu.core_type = #tpu.core_type<tc>, window_params = [{transform_indices = @transform_0, window_bounds = array<i64: 16, 32>}, {transform_indices = @transform_1, window_bounds = array<i64: 16, 1>}, {transform_indices = @transform_2, window_bounds = array<i64: 16, 1>}, {transform_indices = @transform_3, window_bounds = array<i64: 1, 1, 1>}, {transform_indices = @transform_4, window_bounds = array<i64: 1, 1, 1>}]} {
    %c0_i32 = arith.constant 0 : i32
    %0 = arith.cmpi eq, %arg1, %c0_i32 : i32
    %1 = arith.extui %0 : i1 to i32
    %c0_i32_0 = arith.constant 0 : i32
    %2 = arith.cmpi ne, %1, %c0_i32_0 : i32
    scf.if %2 {
      %cst_23 = arith.constant 0.000000e+00 : f32
      %49 = vector.broadcast %cst_23 : f32 to vector<1x1xf32>
      %c0_24 = arith.constant 0 : index
      %c0_25 = arith.constant 0 : index
      %c0_26 = arith.constant 0 : index
      %50 = vector.load %arg5[%c0_24, %c0_25, %c0_26] : memref<1x1x1xf32, #tpu.memory_space<vmem>>, vector<1x1x1xf32>
      %51 = vector.shape_cast %50 : vector<1x1x1xf32> to vector<1x1xf32>
      %52 = vector.shape_cast %49 : vector<1x1xf32> to vector<1x1x1xf32>
      tpu.vector_store %arg5[%c0_24, %c0_25, %c0_26], %52 {strides = array<i32>} : memref<1x1x1xf32, #tpu.memory_space<vmem>>, vector<1x1x1xf32>,
      %cst_27 = arith.constant 0.000000e+00 : f32
      %53 = vector.broadcast %cst_27 : f32 to vector<1x1xf32>
      %c0_28 = arith.constant 0 : index
      %c0_29 = arith.constant 0 : index
      %c0_30 = arith.constant 0 : index
      %54 = vector.load %arg6[%c0_28, %c0_29, %c0_30] : memref<1x1x1xf32, #tpu.memory_space<vmem>>, vector<1x1x1xf32>
      %55 = vector.shape_cast %54 : vector<1x1x1xf32> to vector<1x1xf32>
      %56 = vector.shape_cast %53 : vector<1x1xf32> to vector<1x1x1xf32>
      tpu.vector_store %arg6[%c0_28, %c0_29, %c0_30], %56 {strides = array<i32>} : memref<1x1x1xf32, #tpu.memory_space<vmem>>, vector<1x1x1xf32>,
    } else {
    }
    %c1_i32 = arith.constant 1 : i32
    %3 = arith.muli %arg0, %c1_i32 : i32
    %4 = arith.addi %3, %arg1 : i32
    %c16_i32 = arith.constant 16 : i32
    %5 = arith.muli %4, %c16_i32 : i32
    %6 = tpu.iota {dimensions = array<i32: 0>} : vector<16x1xi32>
    %7 = vector.broadcast %5 : i32 to vector<16x1xi32>
    %8 = arith.addi %7, %6 : vector<16x1xi32>
    %c16_i32_1 = arith.constant 16 : i32
    %9 = vector.broadcast %c16_i32_1 : i32 to vector<16x1xi32>
    %10 = arith.cmpi slt, %8, %9 : vector<16x1xi32>
    %c0 = arith.constant 0 : index
    %c0_2 = arith.constant 0 : index
    %11 = vector.load %arg3[%c0, %c0_2] : memref<16x1xi32, #tpu.memory_space<vmem>>, vector<16x1xi32>
    %c-1_i32 = arith.constant -1 : i32
    %12 = vector.broadcast %c-1_i32 : i32 to vector<16x1xi32>
    %13 = arith.select %10, %11, %12 : vector<16x1xi1>, vector<16x1xi32>
    %c0_3 = arith.constant 0 : index
    %c0_4 = arith.constant 0 : index
    %14 = vector.load %arg4[%c0_3, %c0_4] : memref<16x1xf32, #tpu.memory_space<vmem>>, vector<16x1xf32>
    %cst = arith.constant 0.000000e+00 : f32
    %15 = vector.broadcast %cst : f32 to vector<16x1xf32>
    %16 = arith.select %10, %14, %15 : vector<16x1xi1>, vector<16x1xf32>
    %c0_5 = arith.constant 0 : index
    %c0_6 = arith.constant 0 : index
    %17 = vector.load %arg2[%c0_5, %c0_6] : memref<16x32xf32, #tpu.memory_space<vmem>>, vector<16x32xf32>
    %18 = tpu.iota {dimensions = array<i32: 1>} : vector<1x32xi32>
    %19 = vector.broadcast %18 : vector<1x32xi32> to vector<16x32xi32>
    %20 = vector.broadcast %13 : vector<16x1xi32> to vector<16x32xi32>
    %21 = arith.cmpi eq, %19, %20 : vector<16x32xi32>
    %cst_7 = arith.constant 0.000000e+00 : f32
    %22 = vector.broadcast %cst_7 : f32 to vector<16x32xf32>
    %23 = arith.select %21, %17, %22 : vector<16x32xi1>, vector<16x32xf32>
    %cst_8 = arith.constant dense<0.000000e+00> : vector<16xf32>
    %24 = vector.multi_reduction <add>, %23, %cst_8 [1] : vector<16x32xf32> to vector<16xf32>
    %25 = vector.shape_cast %24 : vector<16xf32> to vector<16x1xf32>
    %c0_9 = arith.constant 0 : index
    %c0_10 = arith.constant 0 : index
    %c0_11 = arith.constant 0 : index
    %26 = vector.load %arg5[%c0_9, %c0_10, %c0_11] : memref<1x1x1xf32, #tpu.memory_space<vmem>>, vector<1x1x1xf32>
    %27 = vector.shape_cast %26 : vector<1x1x1xf32> to vector<1x1xf32>
    %28 = arith.mulf %25, %16 : vector<16x1xf32>
    %29 = vector.shape_cast %28 : vector<16x1xf32> to vector<1x16x1xf32>
    %cst_12 = arith.constant dense<0.000000e+00> : vector<1xf32>
    %30 = vector.multi_reduction <add>, %29, %cst_12 [1, 2] : vector<1x16x1xf32> to vector<1xf32>
    %31 = vector.shape_cast %30 : vector<1xf32> to vector<1x1x1xf32>
    %32 = vector.extract %31[0, 0, 0] : f32 from vector<1x1x1xf32>
    %33 = vector.broadcast %32 : f32 to vector<1x1xf32>
    %34 = arith.addf %27, %33 : vector<1x1xf32>
    %c0_13 = arith.constant 0 : index
    %c0_14 = arith.constant 0 : index
    %c0_15 = arith.constant 0 : index
    %35 = vector.load %arg5[%c0_13, %c0_14, %c0_15] : memref<1x1x1xf32, #tpu.memory_space<vmem>>, vector<1x1x1xf32>
    %36 = vector.shape_cast %35 : vector<1x1x1xf32> to vector<1x1xf32>
    %37 = vector.shape_cast %34 : vector<1x1xf32> to vector<1x1x1xf32>
    tpu.vector_store %arg5[%c0_13, %c0_14, %c0_15], %37 {strides = array<i32>} : memref<1x1x1xf32, #tpu.memory_space<vmem>>, vector<1x1x1xf32>,
    %c0_16 = arith.constant 0 : index
    %c0_17 = arith.constant 0 : index
    %c0_18 = arith.constant 0 : index
    %38 = vector.load %arg6[%c0_16, %c0_17, %c0_18] : memref<1x1x1xf32, #tpu.memory_space<vmem>>, vector<1x1x1xf32>
    %39 = vector.shape_cast %38 : vector<1x1x1xf32> to vector<1x1xf32>
    %40 = vector.shape_cast %16 : vector<16x1xf32> to vector<1x16x1xf32>
    %cst_19 = arith.constant dense<0.000000e+00> : vector<1xf32>
    %41 = vector.multi_reduction <add>, %40, %cst_19 [1, 2] : vector<1x16x1xf32> to vector<1xf32>
    %42 = vector.shape_cast %41 : vector<1xf32> to vector<1x1x1xf32>
    %43 = vector.extract %42[0, 0, 0] : f32 from vector<1x1x1xf32>
    %44 = vector.broadcast %43 : f32 to vector<1x1xf32>
    %45 = arith.addf %39, %44 : vector<1x1xf32>
    %c0_20 = arith.constant 0 : index
    %c0_21 = arith.constant 0 : index
    %c0_22 = arith.constant 0 : index
    %46 = vector.load %arg6[%c0_20, %c0_21, %c0_22] : memref<1x1x1xf32, #tpu.memory_space<vmem>>, vector<1x1x1xf32>
    %47 = vector.shape_cast %46 : vector<1x1x1xf32> to vector<1x1xf32>
    %48 = vector.shape_cast %45 : vector<1x1xf32> to vector<1x1x1xf32>
    tpu.vector_store %arg6[%c0_20, %c0_21, %c0_22], %48 {strides = array<i32>} : memref<1x1x1xf32, #tpu.memory_space<vmem>>, vector<1x1x1xf32>,
    return
  }
  func.func @transform_0(%arg0: i32, %arg1: i32) -> (i32, i32) {
    %c1_i32 = arith.constant 1 : i32
    %0 = arith.muli %arg0, %c1_i32 : i32
    %1 = arith.addi %0, %arg1 : i32
    %c0_i32 = arith.constant 0 : i32
    %2 = arith.minsi %1, %c0_i32 : i32
    %c0_i32_0 = arith.constant 0 : i32
    %c0_i32_1 = arith.constant 0 : i32
    return %2, %c0_i32_0 : i32, i32
  }
  func.func @transform_1(%arg0: i32, %arg1: i32) -> (i32, i32) {
    %c1_i32 = arith.constant 1 : i32
    %0 = arith.muli %arg0, %c1_i32 : i32
    %1 = arith.addi %0, %arg1 : i32
    %c0_i32 = arith.constant 0 : i32
    %2 = arith.minsi %1, %c0_i32 : i32
    %c0_i32_0 = arith.constant 0 : i32
    %c0_i32_1 = arith.constant 0 : i32
    return %2, %c0_i32_0 : i32, i32
  }
  func.func @transform_2(%arg0: i32, %arg1: i32) -> (i32, i32) {
    %c1_i32 = arith.constant 1 : i32
    %0 = arith.muli %arg0, %c1_i32 : i32
    %1 = arith.addi %0, %arg1 : i32
    %c0_i32 = arith.constant 0 : i32
    %2 = arith.minsi %1, %c0_i32 : i32
    %c0_i32_0 = arith.constant 0 : i32
    %c0_i32_1 = arith.constant 0 : i32
    return %2, %c0_i32_0 : i32, i32
  }
  func.func @transform_3(%arg0: i32, %arg1: i32) -> (i32, i32, i32) {
    %c0_i32 = arith.constant 0 : i32
    %c0_i32_0 = arith.constant 0 : i32
    %c0_i32_1 = arith.constant 0 : i32
    return %arg0, %c0_i32, %c0_i32_0 : i32, i32, i32
  }
  func.func @transform_4(%arg0: i32, %arg1: i32) -> (i32, i32, i32) {
    %c0_i32 = arith.constant 0 : i32
    %c0_i32_0 = arith.constant 0 : i32
    %c0_i32_1 = arith.constant 0 : i32
    return %arg0, %c0_i32, %c0_i32_0 : i32, i32, i32
  }
}

</mosaic_0001>

<llo_original>
// kernel: language_model_criterion.1
$region0: #{language_model_criterion.1}
  #allocation0 [shape = 'u32[]', space=smem, size = 0x4, offset = 0x4, fixed_abs, tag = 'smem constant byte address 0x4 - core index']
  #allocation1 [shape = 'u32[144,128]{1,0:T(1,128)}', space=vmem, size = 0x12000, scoped, tag = 'internal scratch']
  %s0 = inlined_call_operand.vmem [shape: f32[16,32], index: 0, kind: input, shape index: {}]
  %s1 = inlined_call_operand.vmem [shape: s32[16,1], index: 1, kind: input, shape index: {}]
  %s2 = inlined_call_operand.vmem [shape: f32[16,1], index: 2, kind: input, shape index: {}]
  %s3 = inlined_call_operand.hbm [shape: f32[1,1,1], index: 3, kind: output, shape index: {0}]
  %s4 = inlined_call_operand.hbm [shape: f32[1,1,1], index: 4, kind: output, shape index: {1}]
  %5 = xla_tuple %s3, %s4
  %s6 = sld [smem:[#allocation0]]
  $region34: #{language_model_criterion.1} parent=0
    _
  %s8 = ssub.s32 1, %s6
  %s9 = scalar_select 0, %s8, %s6
  $region1: #{language_model_criterion.1} parent=0
    #allocation2 [shape = 'u8[512]{0}', space=vmem, size = 0x400, scoped, tag = 'output window, operand 0, single buffered']
    #allocation3 [shape = 's32[1]{0}', space=sflag, size = 0x4, scoped, tag = 'scoped memory for language_model_criterion.1']
    #allocation4 [shape = 'u8[512]{0}', space=vmem, size = 0x400, scoped, tag = 'output window, operand 1, single buffered']
    #allocation5 [shape = 's32[1]{0}', space=sflag, size = 0x4, scoped, tag = 'scoped memory for language_model_criterion.1']
    %10 = vsyncpa [#allocation3], 0
    %11 = vsyncpa [#allocation5], 0
    // Predicated region
    $region2: #{language_model_criterion.1} parent=1 // pred_check
      _
    $region3: #{language_model_criterion.1} parent=1 // pred_check_branch
      %13 = sbr.rel (0) target = $region5
    $region4: #{language_model_criterion.1} parent=1 // pred_region
      %s14 = sadd.s32 0, 0
      %p15 = scmp.lt.s32.totalorder %s14, 0
      %s16 = scalar_select %p15, %s14, 0
      %s17 = smul.u32 2, %s16
      %p18 = scmp.lt.s32.totalorder %s17, 1
      %s19 = scalar_select %p18, %s17, 1
      %s20 = smul.addr %s19, 8
      %s21 = scalar_lea.vmem %s0, %s20
      %s22 = sadd.s32 0, 0
      %p23 = scmp.lt.s32.totalorder %s22, 0
      %s24 = scalar_select %p23, %s22, 0
      %s25 = smul.u32 2, %s24
    $region5: #{language_model_criterion.1} parent=1 // pred_fallthru
      _
    // Predicated region
    $region6: #{language_model_criterion.1} parent=1 // pred_check
      _
    $region7: #{language_model_criterion.1} parent=1 // pred_check_branch
      %27 = sbr.rel (0) target = $region9
    $region8: #{language_model_criterion.1} parent=1 // pred_region
      %s28 = sadd.s32 0, 0
      %p29 = scmp.lt.s32.totalorder %s28, 0
      %s30 = scalar_select %p29, %s28, 0
      %s31 = smul.u32 2, %s30
      %p32 = scmp.lt.s32.totalorder %s31, 1
      %s33 = scalar_select %p32, %s31, 1
      %s34 = smul.addr %s33, 8
      %s35 = scalar_lea.vmem %s1, %s34
      %s36 = sadd.s32 0, 0
      %p37 = scmp.lt.s32.totalorder %s36, 0
      %s38 = scalar_select %p37, %s36, 0
      %s39 = smul.u32 2, %s38
    $region9: #{language_model_criterion.1} parent=1 // pred_fallthru
      _
    // Predicated region
    $region10: #{language_model_criterion.1} parent=1 // pred_check
      _
    $region11: #{language_model_criterion.1} parent=1 // pred_check_branch
      %41 = sbr.rel (0) target = $region13
    $region12: #{language_model_criterion.1} parent=1 // pred_region
      %s42 = sadd.s32 0, 0
      %p43 = scmp.lt.s32.totalorder %s42, 0
      %s44 = scalar_select %p43, %s42, 0
      %s45 = smul.u32 2, %s44
      %p46 = scmp.lt.s32.totalorder %s45, 1
      %s47 = scalar_select %p46, %s45, 1
      %s48 = smul.addr %s47, 8
      %s49 = scalar_lea.vmem %s2, %s48
      %s50 = sadd.s32 0, 0
      %p51 = scmp.lt.s32.totalorder %s50, 0
      %s52 = scalar_select %p51, %s50, 0
      %s53 = smul.u32 2, %s52
    $region13: #{language_model_criterion.1} parent=1 // pred_fallthru
      _
    %s54 = sadd.s32 0, 0
    %p55 = scmp.lt.s32.totalorder %s54, 0
    %s56 = scalar_select %p55, %s54, 0
    %s57 = smul.u32 2, %s56
    %p58 = scmp.lt.s32.totalorder %s57, 1
    %s59 = scalar_select %p58, %s57, 1
    %s60 = smul.addr %s59, 8
    %s61 = scalar_lea.vmem %s0, %s60
    %s62 = sadd.s32 0, 0
    %p63 = scmp.lt.s32.totalorder %s62, 0
    %s64 = scalar_select %p63, %s62, 0
    %s65 = smul.u32 2, %s64
    %p66 = scmp.lt.s32.totalorder %s65, 1
    %s67 = scalar_select %p66, %s65, 1
    %s68 = smul.addr %s67, 8
    %s69 = scalar_lea.vmem %s1, %s68
    %s70 = sadd.s32 0, 0
    %p71 = scmp.lt.s32.totalorder %s70, 0
    %s72 = scalar_select %p71, %s70, 0
    %s73 = smul.u32 2, %s72
    %p74 = scmp.lt.s32.totalorder %s73, 1
    %s75 = scalar_select %p74, %s73, 1
    %s76 = smul.addr %s75, 8
    %s77 = scalar_lea.vmem %s2, %s76
    %s78 = sadd.s32 0, 0
    %p79 = scmp.lt.s32.totalorder %s78, 0
    %s80 = scalar_select %p79, %s78, 0
    %s81 = smul.u32 2, %s80
    %p82 = scmp.lt.s32.totalorder %s81, 1
    %s83 = scalar_select %p82, %s81, 1
    %s84 = smul.addr %s83, 8
    %s85 = scalar_lea.vmem %s0, %s84
    %s86 = sadd.s32 0, 0
    %p87 = scmp.lt.s32.totalorder %s86, 0
    %s88 = scalar_select %p87, %s86, 0
    %s89 = smul.u32 2, %s88
    %s90 = sadd.s32 0, 0
    %p91 = scmp.lt.s32.totalorder %s90, 0
    %s92 = scalar_select %p91, %s90, 0
    %s93 = smul.u32 2, %s92
    %p94 = scmp.lt.s32.totalorder %s93, 1
    %s95 = scalar_select %p94, %s93, 1
    %s96 = smul.addr %s95, 8
    %s97 = scalar_lea.vmem %s1, %s96
    %s98 = sadd.s32 0, 0
    %p99 = scmp.lt.s32.totalorder %s98, 0
    %s100 = scalar_select %p99, %s98, 0
    %s101 = smul.u32 2, %s100
    %s102 = sadd.s32 0, 0
    %p103 = scmp.lt.s32.totalorder %s102, 0
    %s104 = scalar_select %p103, %s102, 0
    %s105 = smul.u32 2, %s104
    %p106 = scmp.lt.s32.totalorder %s105, 1
    %s107 = scalar_select %p106, %s105, 1
    %s108 = smul.addr %s107, 8
    %s109 = scalar_lea.vmem %s2, %s108
    %s110 = sadd.s32 0, 0
    %p111 = scmp.lt.s32.totalorder %s110, 0
    %s112 = scalar_select %p111, %s110, 0
    %s113 = smul.u32 2, %s112
    %p114 = scmp.eq.s32.totalorder 0, 0
    // Predicated region
    $region14: #{language_model_criterion.1} parent=1 // pred_check
      %p115 = pneg %p114
    $region15: #{language_model_criterion.1} parent=1 // pred_check_branch
      %117 = sbr.rel (%p115) target = $region17
    $region16: #{language_model_criterion.1} parent=1 // pred_region
      %vm118 = vcmask 0
      %119 = vst.msk [vmem:[#allocation2] sm:$0x1] %vm118, 0.0
      %120 = vst.msk [vmem:[#allocation4] sm:$0x1] %vm118, 0.0
    $region17: #{language_model_criterion.1} parent=1 // pred_fallthru
      _
    %s121 = sadd.s32 0, 0
    %s122 = smul.u32 %s121, 16
    %v123 = vlaneseq
    %v124 = vshrl.u32 %v123, 7
    %v125 = vadd.s32 %v124, 8
    %v126 = vstv %s122
    %v127 = vadd.s32 %v126, %v124
    %v128 = vadd.s32 %v126, %v125
    %vm129 = vcmp.lt.s32.totalorder %v127, 16
    %vm130 = vcmp.lt.s32.totalorder %v128, 16
    %v131 = vld [vmem:[%s97] sm:$0xff]
    %v132 = vld [vmem:[%s97 + $0x8] sm:$0xff]
    %v133 = vsel %vm129, %v131, 4294967295
    %v134 = vsel %vm130, %v132, 4294967295
    %v135 = vld [vmem:[%s109] sm:$0xff]
    %v136 = vld [vmem:[%s109 + $0x8] sm:$0xff]
    %v137 = vsel %vm129, %v135, 0.0
    %v138 = vsel %vm130, %v136, 0.0
    %v139 = vld [vmem:[%s85] sm:$0xff]
    %v140 = vld [vmem:[%s85 + $0x8] sm:$0xff]
    %v141 = vlaneseq
    %v142 = vand.u32 %v141, 127
    %143 = vset.pattern.permute.xlu0 0
    %144 = vperm.xlu0 %143, %v133
    %v145 = vpop.permute.xlu0 %144
    %146 = vset.pattern.permute.xlu0 0
    %147 = vperm.xlu0 %146, %v134
    %v148 = vpop.permute.xlu0 %147
    %vm149 = vcmp.eq.s32.totalorder %v142, %v145
    %vm150 = vcmp.eq.s32.totalorder %v142, %v148
    %v151 = vsel %vm149, %v139, 0.0
    %v152 = vsel %vm150, %v140, 0.0
    %vm153 = vcmask 261120
    %v154 = vsel %vm153, %v151, 0.0
    %155 = vadd.xlane.f32.xlu0 %v154
    %v156 = vpop.xlane.xlu0 %155
    %v157 = vsel %vm153, %v152, 0.0
    %158 = vadd.xlane.f32.xlu0 %v157
    %v159 = vpop.xlane.xlu0 %158
    %v160 = vld [vmem:[#allocation2] sm:$0x1]
    %v161 = vmul.f32 %v156, %v137
    %v162 = vmul.f32 %v159, %v138
    %vm163 = vcmask 7168
    %v164 = vsel %vm163, %v161, 0.0
    %v165 = vsel %vm163, %v162, 0.0
    %v166 = vadd.f32 %v164, %v165
    %167 = vadd.xlane.f32.xlu0 %v166
    %v168 = vpop.xlane.xlu0 %167
    %v169 = vrot.slane %v168, 4
    %v170 = vadd.f32 %v168, %v169
    %v171 = vrot.slane %v170, 2
    %v172 = vadd.f32 %v170, %v171
    %v173 = vrot.slane %v172, 1
    %v174 = vadd.f32 %v172, %v173
    %s175 = vtos %v174
    %v176 = vstv %s175
    %v177 = vadd.f32 %v160, %v176
    %vm178 = vcmask 0
    %179 = vst.msk [vmem:[#allocation2] sm:$0x1] %vm178, %v177
    %v180 = vld [vmem:[#allocation4] sm:$0x1]
    %v181 = vsel %vm163, %v137, 0.0
    %v182 = vsel %vm163, %v138, 0.0
    %v183 = vadd.f32 %v181, %v182
    %184 = vadd.xlane.f32.xlu0 %v183
    %v185 = vpop.xlane.xlu0 %184
    %v186 = vrot.slane %v185, 4
    %v187 = vadd.f32 %v185, %v186
    %v188 = vrot.slane %v187, 2
    %v189 = vadd.f32 %v187, %v188
    %v190 = vrot.slane %v189, 1
    %v191 = vadd.f32 %v189, %v190
    %s192 = vtos %v191
    %v193 = vstv %s192
    %v194 = vadd.f32 %v180, %v193
    %195 = vst.msk [vmem:[#allocation4] sm:$0x1] %vm178, %v194
    // Predicated region
    $region18: #{language_model_criterion.1} parent=1 // pred_check
      _
    $region19: #{language_model_criterion.1} parent=1 // pred_check_branch
      %197 = sbr.rel (0) target = $region21
    $region20: #{language_model_criterion.1} parent=1 // pred_region
      %s199 = ssub.s32 16, 16
      %200 = vsyncadd [#allocation3], %s199
      %s202 = sshll.u32 [#allocation2], 4
      %s203 = int_to_ptr.vmem [resolvable:$true] %s202
      %205 = dma.vmem_to_hbm [thread:$0]  %s203, 16, %s3, [#allocation3]
    $region21: #{language_model_criterion.1} parent=1 // pred_fallthru
      _
    // Predicated region
    $region22: #{language_model_criterion.1} parent=1 // pred_check
      _
    $region23: #{language_model_criterion.1} parent=1 // pred_check_branch
      %207 = sbr.rel (0) target = $region25
    $region24: #{language_model_criterion.1} parent=1 // pred_region
      %s209 = ssub.s32 16, 16
      %210 = vsyncadd [#allocation5], %s209
      %s212 = sshll.u32 [#allocation4], 4
      %s213 = int_to_ptr.vmem [resolvable:$true] %s212
      %215 = dma.vmem_to_hbm [thread:$0]  %s213, 16, %s4, [#allocation5]
    $region25: #{language_model_criterion.1} parent=1 // pred_fallthru
      _
    // Predicated region
    $region26: #{language_model_criterion.1} parent=1 // pred_check
      _
    $region27: #{language_model_criterion.1} parent=1 // pred_check_branch
      %217 = sbr.rel (0) target = $region29
    $region28: #{language_model_criterion.1} parent=1 // pred_region
      %218 = dma.done [#allocation3], 16
    $region29: #{language_model_criterion.1} parent=1 // pred_fallthru
      _
    // Predicated region
    $region30: #{language_model_criterion.1} parent=1 // pred_check
      _
    $region31: #{language_model_criterion.1} parent=1 // pred_check_branch
      %220 = sbr.rel (0) target = $region33
    $region32: #{language_model_criterion.1} parent=1 // pred_region
      %221 = dma.done [#allocation5], 16
    $region33: #{language_model_criterion.1} parent=1 // pred_fallthru
      _
    %222 = vsyncpa [#allocation3], 1
    %223 = vsyncpa [#allocation5], 1

</llo_original>
